<compile_context>
chip_gen: v7x
topology: tpu7x:2x2x1
jax: 0.10.0
libtpu: 0.0.40
codegen_flags: <defaults>
</compile_context>

<pallas_src>
import functools

import jax
import jax.numpy as jnp
from jax import lax
from jax.experimental import pallas as pl
from jax.experimental.pallas import tpu as pltpu


# ----------------------------------------------------------------------------
# Shared helpers
# ----------------------------------------------------------------------------
def _epilogue(s_ab, s_aa, s_bb):
    # dCor = sqrt(sum_AB) / (sum_AA * sum_BB)^(1/4); the 1/n^2 factors cancel.
    # max(., 0) mirrors torch.max(..., 0.) on the covariance term (and guards
    # the variance terms against tiny negative rounding in the moment form).
    s_ab = jnp.maximum(s_ab, 0.0)
    s_aa = jnp.maximum(s_aa, 0.0)
    s_bb = jnp.maximum(s_bb, 0.0)
    return jnp.sqrt(s_ab) / jnp.sqrt(jnp.sqrt(s_aa * s_bb))


def _as11(v):
    """rank-0 scalar -> (1, 1) f32 via broadcast (Mosaic-friendly)."""
    return jnp.zeros((1, 1), jnp.float32) + v


def _hw_vmem_capacity():
    cap = 64 << 20                      # conservative default (v7x per-TC VMEM)
    try:
        cap = int(pltpu.get_tpu_info().vmem_capacity_bytes)
    except Exception:
        pass
    return cap


def _vmem_limit(requested_bytes):
    """Scoped-VMEM budget: at least 32 MiB, at most physical - 8 MiB."""
    cap = max(_hw_vmem_capacity() - (8 << 20), 32 << 20)
    return int(min(max(int(requested_bytes), 32 << 20), cap))


def _monolithic_cutoff():
    return 1024 if _hw_vmem_capacity() >= (100 << 20) else 512


# ----------------------------------------------------------------------------
# Small-n path: one monolithic block, no grid (exact double-centering).
# ----------------------------------------------------------------------------
def _dcor_small_kernel(x_ref, z_ref, o_ref):
    x = x_ref[...]
    z = z_ref[...]
    n = x.shape[0]
    inv_n = 1.0 / float(n)

    def self_dist(m):
        g = lax.dot_general(m, m, (((1,), (1,)), ((), ())),
                            preferred_element_type=jnp.float32)
        m32 = m.astype(jnp.float32)
        r = jnp.sum(m32 * m32, axis=1, keepdims=True)
        d = r - 2.0 * g + jnp.transpose(r)
        return jnp.sqrt(jnp.maximum(d, 1e-8))

    a = self_dist(x)                                     # (n, n)
    b = self_dist(z)

    # Symmetry: row sums == column sums; grand mean derived from row sums.
    sa = jnp.sum(a, axis=1, keepdims=True)               # (n, 1)
    sb = jnp.sum(b, axis=1, keepdims=True)
    ga = jnp.sum(sa) * (inv_n * inv_n)
    gb = jnp.sum(sb) * (inv_n * inv_n)

    A = a - jnp.transpose(sa) * inv_n - sa * inv_n + ga
    B = b - jnp.transpose(sb) * inv_n - sb * inv_n + gb

    o_ref[0, 0] = _epilogue(jnp.sum(A * B), jnp.sum(A * A), jnp.sum(B * B))


def _dcor_monolithic(x, z):
    n, dx = x.shape
    _, dz = z.shape
    est = (n * dx * x.dtype.itemsize + n * dz * z.dtype.itemsize
           + 10 * n * n * 4 + (4 << 20))
    out = pl.pallas_call(
        _dcor_small_kernel,
        out_shape=jax.ShapeDtypeStruct((1, 1), jnp.float32),
        in_specs=[pl.BlockSpec(memory_space=pltpu.MemorySpace.VMEM),
                  pl.BlockSpec(memory_space=pltpu.MemorySpace.VMEM)],
        out_specs=pl.BlockSpec(memory_space=pltpu.MemorySpace.SMEM),
        compiler_params=pltpu.CompilerParams(vmem_limit_bytes=_vmem_limit(est)),
    )(x, z)
    return out[0, 0]


# ----------------------------------------------------------------------------
# Large-n path: single-pass tiled kernel (moment identity).
#   grid = (nc, nr); axis 0 = column tile (outer), axis 1 = row tile (inner).
#   Per step a (tm x tn) distance tile of a and of b is produced once, shifted
#   by a global constant and reduced over the sublane axis into lane-dense
#   (1, tn) accumulators.  At the last row tile of each column tile the
#   complete column sums (== row sums by symmetry) are folded into 8 global
#   scalar moments; the last grid step combines them into dCor.
# ----------------------------------------------------------------------------
def _dcor_tiled_kernel(xb_ref, zb_ref, xc_ref, zc_ref, rxc_ref, rzc_ref,   # in
                       o_ref,                                              # out
                       sha_ref, shb_ref,                                   # (1,1)
                       csa_ref, csb_ref, vab_ref, vaa_ref, vbb_ref,        # (1,tn)
                       g_ab, g_aa, g_bb, h_ab, h_aa, h_bb, t_a, t_b,       # (1,1)
                       *, n):
    c = pl.program_id(0)                  # column-tile index (outer, slow)
    r = pl.program_id(1)                  # row-tile index (inner, fast)
    nc = pl.num_programs(0)
    nr = pl.num_programs(1)

    xb = xb_ref[...]                      # (tm, dx)
    zb = zb_ref[...]                      # (tm, dz)
    xc = xc_ref[...]                      # (tn, dx)
    zc = zc_ref[...]                      # (tn, dz)

    # Distance tiles: Gram on the MXU in the *native* dtype, f32 accumulate.
    ga = lax.dot_general(xb, xc, (((1,), (1,)), ((), ())),
                         preferred_element_type=jnp.float32)   # (tm, tn)
    gb = lax.dot_general(zb, zc, (((1,), (1,)), ((), ())),
                         preferred_element_type=jnp.float32)
    xb32 = xb.astype(jnp.float32)
    zb32 = zb.astype(jnp.float32)
    ra_row = jnp.sum(xb32 * xb32, axis=1, keepdims=True)        # (tm, 1) cheap
    rb_row = jnp.sum(zb32 * zb32, axis=1, keepdims=True)
    a = jnp.sqrt(jnp.maximum(ra_row - 2.0 * ga + rxc_ref[...], 1e-8))
    b = jnp.sqrt(jnp.maximum(rb_row - 2.0 * gb + rzc_ref[...], 1e-8))

    # Global constant shift estimated from the very first tile.  dCor is
    # invariant to a constant shift of the distance matrices; the shift keeps
    # the single-pass moment identity well conditioned in f32.
    @pl.when((c == 0) & (r == 0))
    def _estimate_shift():
        inv = 1.0 / float(a.shape[0] * a.shape[1])
        sha_ref[...] = _as11(jnp.sum(a) * inv)
        shb_ref[...] = _as11(jnp.sum(b) * inv)

    a = a - sha_ref[...]
    b = b - shb_ref[...]

    # Sublane-axis (mostly-VPU) partial reductions, lane-dense (1, tn).
    pa = jnp.sum(a, axis=0, keepdims=True)
    pb = jnp.sum(b, axis=0, keepdims=True)
    pab = jnp.sum(a * b, axis=0, keepdims=True)
    paa = jnp.sum(a * a, axis=0, keepdims=True)
    pbb = jnp.sum(b * b, axis=0, keepdims=True)

    @pl.when(r == 0)
    def _init_cols():
        csa_ref[...] = pa
        csb_ref[...] = pb
        vab_ref[...] = pab
        vaa_ref[...] = paa
        vbb_ref[...] = pbb

    @pl.when(r != 0)
    def _acc_cols():
        csa_ref[...] += pa
        csb_ref[...] += pb
        vab_ref[...] += pab
        vaa_ref[...] += paa
        vbb_ref[...] += pbb

    @pl.when(r == nr - 1)
    def _finish_column_tile():
        sa = csa_ref[...]        # complete column sums of shifted a for tile c
        sb = csb_ref[...]        #   (== row sums sa_j by matrix symmetry)
        p_ab = _as11(jnp.sum(vab_ref[...]))
        p_aa = _as11(jnp.sum(vaa_ref[...]))
        p_bb = _as11(jnp.sum(vbb_ref[...]))
        q_ab = _as11(jnp.sum(sa * sb))
        q_aa = _as11(jnp.sum(sa * sa))
        q_bb = _as11(jnp.sum(sb * sb))
        u_a = _as11(jnp.sum(sa))
        u_b = _as11(jnp.sum(sb))

        @pl.when(c == 0)
        def _init_scalars():
            g_ab[...] = p_ab
            g_aa[...] = p_aa
            g_bb[...] = p_bb
            h_ab[...] = q_ab
            h_aa[...] = q_aa
            h_bb[...] = q_bb
            t_a[...] = u_a
            t_b[...] = u_b

        @pl.when(c != 0)
        def _acc_scalars():
            g_ab[...] += p_ab
            g_aa[...] += p_aa
            g_bb[...] += p_bb
            h_ab[...] += q_ab
            h_aa[...] += q_aa
            h_bb[...] += q_bb
            t_a[...] += u_a
            t_b[...] += u_b

        @pl.when(c == nc - 1)
        def _finalize():
            inv_n = 1.0 / float(n)
            inv_n2 = inv_n * inv_n
            # sum(A*B) = S_ab - (2/n) * sum_j sa_j sb_j + Sa*Sb / n^2
            sum_ab = g_ab[...] - 2.0 * inv_n * h_ab[...] + t_a[...] * t_b[...] * inv_n2
            sum_aa = g_aa[...] - 2.0 * inv_n * h_aa[...] + t_a[...] * t_a[...] * inv_n2
            sum_bb = g_bb[...] - 2.0 * inv_n * h_bb[...] + t_b[...] * t_b[...] * inv_n2
            dcor = _epilogue(sum_ab, sum_aa, sum_bb)      # (1, 1)
            o_ref[0, 0] = dcor[0, 0]


def _dcor_tiled(x, z, tm, tn):
    n, dx = x.shape
    _, dz = z.shape
    nr = n // tm
    nc = n // tn

    # Hoisted lane-dense squared row norms (computed once, streamed per column
    # tile).  Row-block norms are recomputed in-kernel (O(tm*d), negligible).
    rx = jnp.sum(x.astype(jnp.float32) ** 2, axis=1).reshape(1, n)
    rz = jnp.sum(z.astype(jnp.float32) ** 2, axis=1).reshape(1, n)

    est = (2 * (tm * (dx + dz) + tn * (dx + dz) + 2 * tn) * 4   # dbl-buffered blocks
           + 8 * tm * tn * 4                                    # per-step f32 temps
           + 5 * 8 * tn * 4 + (64 << 10)                        # scratch
           + (6 << 20))                                         # headroom

    kernel = functools.partial(_dcor_tiled_kernel, n=n)
    out = pl.pallas_call(
        kernel,
        out_shape=jax.ShapeDtypeStruct((1, 1), jnp.float32),
        grid_spec=pltpu.PrefetchScalarGridSpec(
            num_scalar_prefetch=0,
            grid=(nc, nr),
            in_specs=[
                pl.BlockSpec((tm, dx), lambda c, r: (r, 0)),   # x row block
                pl.BlockSpec((tm, dz), lambda c, r: (r, 0)),   # z row block
                pl.BlockSpec((tn, dx), lambda c, r: (c, 0)),   # x column block
                pl.BlockSpec((tn, dz), lambda c, r: (c, 0)),   # z column block
                pl.BlockSpec((1, tn), lambda c, r: (0, c)),    # ||x_j||^2 (lane-dense)
                pl.BlockSpec((1, tn), lambda c, r: (0, c)),    # ||z_j||^2
            ],
            out_specs=pl.BlockSpec(memory_space=pltpu.MemorySpace.SMEM),
            scratch_shapes=[
                pltpu.VMEM((1, 1), jnp.float32),    # shift estimate for a
                pltpu.VMEM((1, 1), jnp.float32),    # shift estimate for b
                pltpu.VMEM((1, tn), jnp.float32),   # column sums of a'
                pltpu.VMEM((1, tn), jnp.float32),   # column sums of b'
                pltpu.VMEM((1, tn), jnp.float32),   # column partials of a'*b'
                pltpu.VMEM((1, tn), jnp.float32),   # column partials of a'*a'
                pltpu.VMEM((1, tn), jnp.float32),   # column partials of b'*b'
                pltpu.VMEM((1, 1), jnp.float32),    # Σ a'b'
                pltpu.VMEM((1, 1), jnp.float32),    # Σ a'a'
                pltpu.VMEM((1, 1), jnp.float32),    # Σ b'b'
                pltpu.VMEM((1, 1), jnp.float32),    # Σ sa'·sb'
                pltpu.VMEM((1, 1), jnp.float32),    # Σ sa'²
                pltpu.VMEM((1, 1), jnp.float32),    # Σ sb'²
                pltpu.VMEM((1, 1), jnp.float32),    # Σ sa'
                pltpu.VMEM((1, 1), jnp.float32),    # Σ sb'
            ]),
        # Both axes are sequential (shared scratch accumulators).
        # TODO(synk): v7x megacore - make one axis 'parallel' with per-core
        # partial moment outputs combined in a tiny epilogue.
        compiler_params=pltpu.CompilerParams(
            dimension_semantics=("arbitrary", "arbitrary"),
            vmem_limit_bytes=_vmem_limit(est)),
    )(x, z, x, z, rx, rz)
    return out[0, 0]


# ----------------------------------------------------------------------------
# Tile selection + wrapper
# ----------------------------------------------------------------------------
def _pick_tiles(n):
    cap = _hw_vmem_capacity()
    budget = (20 << 20) if cap <= (64 << 20) else (44 << 20)
    # Column tile: lane-dense multiple of 128 dividing n (or the whole axis).
    tn = n
    if n > 2048:
        for cand in (2048, 1024, 512, 256, 128):
            if n % cand == 0:
                tn = cand
                break
        # TODO(synk): masked tail tiles for n not divisible by 128.
    # Row tile: MXU-friendly multiple of 8, constrained by f32 tile temporaries.
    tm = n
    for cand in (512, 256, 128, 64, 32, 16, 8):
        if n % cand == 0 and 8 * cand * tn * 4 <= budget:
            tm = cand
            break
    return tm, tn


def distance_correlation(x, z, *, row_tile=None, col_tile=None):
    """Pallas equivalent of DistanceCorrelation.forward(x, z) -> scalar."""
    n, _ = x.shape
    nz, _ = z.shape
    assert n == nz, "x and z must have the same batch dimension"

    if row_tile is None and col_tile is None and n <= _monolithic_cutoff():
        return _dcor_monolithic(x, z)

    tm, tn = _pick_tiles(n)
    if row_tile is not None:
        tm = int(row_tile)
    if col_tile is not None:
        tn = int(col_tile)

    tm_ok = (tm < n) and (n % tm == 0) and (tm % 8 == 0)
    tn_ok = (tn == n) or ((n % tn == 0) and (tn % 128 == 0))
    if not (tm_ok and tn_ok):
        # TODO(synk): masked tail tiles; awkward sizes fall back to one block.
        return _dcor_monolithic(x, z)
    return _dcor_tiled(x, z, tm, tn)


# ----------------------------------------------------------------------------
# Pure-JAX reference (transcription of the PyTorch module) + demo
# ----------------------------------------------------------------------------
def _reference(x, z):
    def pdist(a):
        r = jnp.sum(a * a, axis=1, keepdims=True)
        d = r - 2.0 * (a @ a.T) + r.T
        return jnp.sqrt(jnp.clip(d, 1e-8))

    n = x.shape[0]
    a, b = pdist(x), pdist(z)
    A = a - jnp.mean(a, 1)[None, :] - jnp.mean(a, 0)[:, None] + jnp.mean(a)
    B = b - jnp.mean(b, 1)[None, :] - jnp.mean(b, 0)[:, None] + jnp.mean(b)
    dcov = jnp.sqrt(jnp.maximum(jnp.mean(A * B) / n**2, 0.0))
    dvx = jnp.sqrt(jnp.mean(A * A) / n**2)
    dvy = jnp.sqrt(jnp.mean(B * B) / n**2)
    return dcov / jnp.sqrt(dvx * dvy)


if __name__ == "__main__":
    key = jax.random.PRNGKey(0)
    kx, kz, kn = jax.random.split(key, 3)

    n, dx, dz = 64, 32, 16
    x = jax.random.normal(kx, (n, dx), dtype=jnp.float32)
    # make z partially correlated with x so dCor is non-trivial
    w = jax.random.normal(kz, (dx, dz), dtype=jnp.float32) * 0.1
    z = x @ w + 0.5 * jax.random.normal(kn, (n, dz), dtype=jnp.float32)

    ref = jax.block_until_ready(_reference(x, z))

    # Small-n fast path: one monolithic block, no grid.
    out_small = jax.block_until_ready(distance_correlation(x, z))
    # Large-n path: single-pass tiled kernel (forced here to exercise it).
    out_tiled = jax.block_until_ready(distance_correlation(x, z, row_tile=16))

    for res in (out_small, out_tiled):
        assert jnp.isfinite(res), "non-finite result"
        assert jnp.allclose(res, ref, rtol=1e-3, atol=1e-4), (res, ref)

    print("KERNEL_OK")
</pallas_src>

<mosaic_0001>
module attributes {stable_mosaic.version = 11 : i64} {
  func.func @_dcor_small_kernel(%arg0: memref<64x32xf32, #tpu.memory_space<vmem>>, %arg1: memref<64x16xf32, #tpu.memory_space<vmem>>, %arg2: memref<1x1xf32, #tpu.memory_space<smem>>) attributes {dimension_semantics = [], scalar_prefetch = 0 : i64, scratch_operands = 0 : i64, tpu.core_type = #tpu.core_type<tc>} {
    %c0 = arith.constant 0 : index
    %c0_0 = arith.constant 0 : index
    %0 = vector.load %arg0[%c0, %c0_0] : memref<64x32xf32, #tpu.memory_space<vmem>>, vector<64x32xf32>
    %c0_1 = arith.constant 0 : index
    %c0_2 = arith.constant 0 : index
    %1 = vector.load %arg1[%c0_1, %c0_2] : memref<64x16xf32, #tpu.memory_space<vmem>>, vector<64x16xf32>
    %cst = arith.constant dense<0.000000e+00> : vector<64x64xf32>
    %2 = tpu.matmul %0, %0, %cst {dimension_numbers = #tpu.dot_dimension_numbers<[1], [1], [0], [0], [0, 0, 1, 0], [], []>} : vector<64x32xf32>, vector<64x32xf32>, vector<64x64xf32> -> vector<64x64xf32>
    %3 = arith.mulf %0, %0 : vector<64x32xf32>
    %cst_3 = arith.constant dense<0.000000e+00> : vector<64xf32>
    %4 = vector.multi_reduction <add>, %3, %cst_3 [1] : vector<64x32xf32> to vector<64xf32>
    %5 = vector.shape_cast %4 : vector<64xf32> to vector<64x1xf32>
    %cst_4 = arith.constant 2.000000e+00 : f32
    %6 = vector.broadcast %cst_4 : f32 to vector<64x64xf32>
    %7 = arith.mulf %6, %2 : vector<64x64xf32>
    %8 = vector.broadcast %5 : vector<64x1xf32> to vector<64x64xf32>
    %9 = arith.subf %8, %7 : vector<64x64xf32>
    %10 = tpu.transpose %5, [1, 0] : vector<64x1xf32> -> vector<1x64xf32>
    %11 = vector.broadcast %10 : vector<1x64xf32> to vector<64x64xf32>
    %12 = arith.addf %9, %11 : vector<64x64xf32>
    %cst_5 = arith.constant 9.99999993E-9 : f32
    %13 = vector.broadcast %cst_5 : f32 to vector<64x64xf32>
    %14 = arith.maximumf %12, %13 : vector<64x64xf32>
    %15 = math.sqrt %14 : vector<64x64xf32>
    %cst_6 = arith.constant dense<0.000000e+00> : vector<64x64xf32>
    %16 = tpu.matmul %1, %1, %cst_6 {dimension_numbers = #tpu.dot_dimension_numbers<[1], [1], [0], [0], [0, 0, 1, 0], [], []>} : vector<64x16xf32>, vector<64x16xf32>, vector<64x64xf32> -> vector<64x64xf32>
    %17 = arith.mulf %1, %1 : vector<64x16xf32>
    %cst_7 = arith.constant dense<0.000000e+00> : vector<64xf32>
    %18 = vector.multi_reduction <add>, %17, %cst_7 [1] : vector<64x16xf32> to vector<64xf32>
    %19 = vector.shape_cast %18 : vector<64xf32> to vector<64x1xf32>
    %cst_8 = arith.constant 2.000000e+00 : f32
    %20 = vector.broadcast %cst_8 : f32 to vector<64x64xf32>
    %21 = arith.mulf %20, %16 : vector<64x64xf32>
    %22 = vector.broadcast %19 : vector<64x1xf32> to vector<64x64xf32>
    %23 = arith.subf %22, %21 : vector<64x64xf32>
    %24 = tpu.transpose %19, [1, 0] : vector<64x1xf32> -> vector<1x64xf32>
    %25 = vector.broadcast %24 : vector<1x64xf32> to vector<64x64xf32>
    %26 = arith.addf %23, %25 : vector<64x64xf32>
    %cst_9 = arith.constant 9.99999993E-9 : f32
    %27 = vector.broadcast %cst_9 : f32 to vector<64x64xf32>
    %28 = arith.maximumf %26, %27 : vector<64x64xf32>
    %29 = math.sqrt %28 : vector<64x64xf32>
    %cst_10 = arith.constant dense<0.000000e+00> : vector<64xf32>
    %30 = vector.multi_reduction <add>, %15, %cst_10 [1] : vector<64x64xf32> to vector<64xf32>
    %31 = vector.shape_cast %30 : vector<64xf32> to vector<64x1xf32>
    %cst_11 = arith.constant dense<0.000000e+00> : vector<64xf32>
    %32 = vector.multi_reduction <add>, %29, %cst_11 [1] : vector<64x64xf32> to vector<64xf32>
    %33 = vector.shape_cast %32 : vector<64xf32> to vector<64x1xf32>
    %34 = vector.shape_cast %31 : vector<64x1xf32> to vector<1x64x1xf32>
    %cst_12 = arith.constant dense<0.000000e+00> : vector<1xf32>
    %35 = vector.multi_reduction <add>, %34, %cst_12 [1, 2] : vector<1x64x1xf32> to vector<1xf32>
    %36 = vector.shape_cast %35 : vector<1xf32> to vector<1x1x1xf32>
    %37 = vector.extract %36[0, 0, 0] : f32 from vector<1x1x1xf32>
    %cst_13 = arith.constant 2.44140625E-4 : f32
    %38 = arith.mulf %37, %cst_13 : f32
    %39 = vector.shape_cast %33 : vector<64x1xf32> to vector<1x64x1xf32>
    %cst_14 = arith.constant dense<0.000000e+00> : vector<1xf32>
    %40 = vector.multi_reduction <add>, %39, %cst_14 [1, 2] : vector<1x64x1xf32> to vector<1xf32>
    %41 = vector.shape_cast %40 : vector<1xf32> to vector<1x1x1xf32>
    %42 = vector.extract %41[0, 0, 0] : f32 from vector<1x1x1xf32>
    %cst_15 = arith.constant 2.44140625E-4 : f32
    %43 = arith.mulf %42, %cst_15 : f32
    %44 = tpu.transpose %31, [1, 0] : vector<64x1xf32> -> vector<1x64xf32>
    %cst_16 = arith.constant 1.562500e-02 : f32
    %45 = vector.broadcast %cst_16 : f32 to vector<1x64xf32>
    %46 = arith.mulf %44, %45 : vector<1x64xf32>
    %47 = vector.broadcast %46 : vector<1x64xf32> to vector<64x64xf32>
    %48 = arith.subf %15, %47 : vector<64x64xf32>
    %cst_17 = arith.constant 1.562500e-02 : f32
    %49 = vector.broadcast %cst_17 : f32 to vector<64x1xf32>
    %50 = arith.mulf %31, %49 : vector<64x1xf32>
    %51 = vector.broadcast %50 : vector<64x1xf32> to vector<64x64xf32>
    %52 = arith.subf %48, %51 : vector<64x64xf32>
    %53 = vector.broadcast %38 : f32 to vector<64x64xf32>
    %54 = arith.addf %52, %53 : vector<64x64xf32>
    %55 = tpu.transpose %33, [1, 0] : vector<64x1xf32> -> vector<1x64xf32>
    %cst_18 = arith.constant 1.562500e-02 : f32
    %56 = vector.broadcast %cst_18 : f32 to vector<1x64xf32>
    %57 = arith.mulf %55, %56 : vector<1x64xf32>
    %58 = vector.broadcast %57 : vector<1x64xf32> to vector<64x64xf32>
    %59 = arith.subf %29, %58 : vector<64x64xf32>
    %cst_19 = arith.constant 1.562500e-02 : f32
    %60 = vector.broadcast %cst_19 : f32 to vector<64x1xf32>
    %61 = arith.mulf %33, %60 : vector<64x1xf32>
    %62 = vector.broadcast %61 : vector<64x1xf32> to vector<64x64xf32>
    %63 = arith.subf %59, %62 : vector<64x64xf32>
    %64 = vector.broadcast %43 : f32 to vector<64x64xf32>
    %65 = arith.addf %63, %64 : vector<64x64xf32>
    %66 = arith.mulf %54, %65 : vector<64x64xf32>
    %67 = vector.shape_cast %66 : vector<64x64xf32> to vector<1x64x64xf32>
    %cst_20 = arith.constant dense<0.000000e+00> : vector<1xf32>
    %68 = vector.multi_reduction <add>, %67, %cst_20 [1, 2] : vector<1x64x64xf32> to vector<1xf32>
    %69 = vector.shape_cast %68 : vector<1xf32> to vector<1x1x1xf32>
    %70 = vector.extract %69[0, 0, 0] : f32 from vector<1x1x1xf32>
    %71 = arith.mulf %54, %54 : vector<64x64xf32>
    %72 = vector.shape_cast %71 : vector<64x64xf32> to vector<1x64x64xf32>
    %cst_21 = arith.constant dense<0.000000e+00> : vector<1xf32>
    %73 = vector.multi_reduction <add>, %72, %cst_21 [1, 2] : vector<1x64x64xf32> to vector<1xf32>
    %74 = vector.shape_cast %73 : vector<1xf32> to vector<1x1x1xf32>
    %75 = vector.extract %74[0, 0, 0] : f32 from vector<1x1x1xf32>
    %76 = arith.mulf %65, %65 : vector<64x64xf32>
    %77 = vector.shape_cast %76 : vector<64x64xf32> to vector<1x64x64xf32>
    %cst_22 = arith.constant dense<0.000000e+00> : vector<1xf32>
    %78 = vector.multi_reduction <add>, %77, %cst_22 [1, 2] : vector<1x64x64xf32> to vector<1xf32>
    %79 = vector.shape_cast %78 : vector<1xf32> to vector<1x1x1xf32>
    %80 = vector.extract %79[0, 0, 0] : f32 from vector<1x1x1xf32>
    %cst_23 = arith.constant 0.000000e+00 : f32
    %81 = arith.maximumf %70, %cst_23 : f32
    %cst_24 = arith.constant 0.000000e+00 : f32
    %82 = arith.maximumf %75, %cst_24 : f32
    %cst_25 = arith.constant 0.000000e+00 : f32
    %83 = arith.maximumf %80, %cst_25 : f32
    %84 = math.sqrt %81 : f32
    %85 = arith.mulf %82, %83 : f32
    %86 = math.sqrt %85 : f32
    %87 = math.sqrt %86 : f32
    %88 = arith.divf %84, %87 : f32
    %c0_26 = arith.constant 0 : index
    %c0_27 = arith.constant 0 : index
    %89 = memref.load %arg2[%c0_26, %c0_27] : memref<1x1xf32, #tpu.memory_space<smem>>
    memref.store %88, %arg2[%c0_26, %c0_27] : memref<1x1xf32, #tpu.memory_space<smem>>
    return
  }
}

</mosaic_0001>

<llo_original>
// kernel: tpu_custom_call.1
$region0: #{tpu_custom_call.1}
  #allocation0 [shape = 'u32[]', space=smem, size = 0x4, offset = 0x4, fixed_abs, tag = 'smem constant byte address 0x4 - core index']
  #allocation1 [shape = 'u32[144,128]{1,0:T(1,128)}', space=vmem, size = 0x12000, scoped, tag = 'internal scratch']
  %s0 = inlined_call_operand.vmem [shape: f32[64,32], index: 0, kind: input, shape index: {}]
  %s1 = inlined_call_operand.vmem [shape: f32[64,16], index: 1, kind: input, shape index: {}]
  %s2 = inlined_call_operand.hbm [shape: f32[1,1], index: 2, kind: output, shape index: {}]
  %s3 = sld [smem:[#allocation0]]
  $region18: #{tpu_custom_call.1} parent=0
    _
  %s5 = ssub.s32 1, %s3
  %s6 = scalar_select 0, %s5, %s3
  $region1: #{tpu_custom_call.1} parent=0
    #allocation2 [shape = 'u8[512]{0}', space=smem, size = 0x200, scoped, tag = 'output window, operand 0, single buffered']
    #allocation3 [shape = 's32[1]{0}', space=sflag, size = 0x4, scoped, tag = 'scoped memory for tpu_custom_call.1']
    %7 = vsyncpa [#allocation3], 0
    // Predicated region
    $region2: #{tpu_custom_call.1} parent=1 // pred_check
      _
    $region3: #{tpu_custom_call.1} parent=1 // pred_check_branch
      %9 = sbr.rel (0) target = $region5
    $region4: #{tpu_custom_call.1} parent=1 // pred_region
      _
    $region5: #{tpu_custom_call.1} parent=1 // pred_fallthru
      _
    // Predicated region
    $region6: #{tpu_custom_call.1} parent=1 // pred_check
      _
    $region7: #{tpu_custom_call.1} parent=1 // pred_check_branch
      %11 = sbr.rel (0) target = $region9
    $region8: #{tpu_custom_call.1} parent=1 // pred_region
      _
    $region9: #{tpu_custom_call.1} parent=1 // pred_fallthru
      _
    %v12 = vld [vmem:[%s0] sm:$0xff]
    %v13 = vld [vmem:[%s0 + $0x8] sm:$0xff]
    %v14 = vld [vmem:[%s0 + $0x10] sm:$0xff]
    %v15 = vld [vmem:[%s0 + $0x18] sm:$0xff]
    %v16 = vld [vmem:[%s0 + $0x20] sm:$0xff]
    %v17 = vld [vmem:[%s0 + $0x28] sm:$0xff]
    %v18 = vld [vmem:[%s0 + $0x30] sm:$0xff]
    %v19 = vld [vmem:[%s0 + $0x38] sm:$0xff]
    %v20 = vld [vmem:[%s1] sm:$0xff]
    %v21 = vld [vmem:[%s1 + $0x8] sm:$0xff]
    %v22 = vld [vmem:[%s1 + $0x10] sm:$0xff]
    %v23 = vld [vmem:[%s1 + $0x18] sm:$0xff]
    %v24 = vld [vmem:[%s1 + $0x20] sm:$0xff]
    %v25 = vld [vmem:[%s1 + $0x28] sm:$0xff]
    %v26 = vld [vmem:[%s1 + $0x30] sm:$0xff]
    %v27 = vld [vmem:[%s1 + $0x38] sm:$0xff]
    %vm28 = vcmask 261120
    %v30 = vsel %vm28, %v12, 0
    %v33 = vsel %vm28, %v13, 0
    %v36 = vsel %vm28, %v14, 0
    %v39 = vsel %vm28, %v15, 0
    %v42 = vsel %vm28, %v16, 0
    %v45 = vsel %vm28, %v17, 0
    %v48 = vsel %vm28, %v18, 0
    %v51 = vsel %vm28, %v19, 0
    %53 = vmatprep.subr.mxu0 0.0
    %54 = vmatpush1.xpose.msra.mxu0 %v30
    %55 = vmatprep.subr.mxu0 0.0
    %56 = vmatpush1.xpose.msra.mxu0 %v33
    %57 = vmatprep.subr.mxu0 0.0
    %58 = vmatpush1.xpose.msra.mxu0 %v36
    %59 = vmatprep.subr.mxu0 0.0
    %60 = vmatpush1.xpose.msra.mxu0 %v39
    %61 = vmatprep.subr.mxu0 0.0
    %62 = vmatpush1.xpose.msra.mxu0 %v42
    %63 = vmatprep.subr.mxu0 0.0
    %64 = vmatpush1.xpose.msra.mxu0 %v45
    %65 = vmatprep.subr.mxu0 0.0
    %66 = vmatpush1.xpose.msra.mxu0 %v48
    %67 = vmatprep.subr.mxu0 0.0
    %68 = vmatpush1.xpose.msra.mxu0 %v51
    %69 = vmatprep.subr.mxu0 0.0
    %70 = vmatpush1.xpose.msra.mxu0 0.0
    %71 = vmatprep.subr.mxu0 0.0
    %72 = vmatpush1.xpose.msra.mxu0 0.0
    %73 = vmatprep.subr.mxu0 0.0
    %74 = vmatpush1.xpose.msra.mxu0 0.0
    %75 = vmatprep.subr.mxu0 0.0
    %76 = vmatpush1.xpose.msra.mxu0 0.0
    %77 = vmatprep.subr.mxu0 0.0
    %78 = vmatpush1.xpose.msra.mxu0 0.0
    %79 = vmatprep.subr.mxu0 0.0
    %80 = vmatpush1.xpose.msra.mxu0 0.0
    %81 = vmatprep.subr.mxu0 0.0
    %82 = vmatpush1.xpose.msra.mxu0 0.0
    %83 = vmatprep.subr.mxu0 0.0
    %84 = vmatpush1.xpose.msra.mxu0 0.0
    %85 = vmatprep.subr.mxu0 0.0
    %86 = vmatpush1.xpose.msra.mxu0 0.0
    %87 = vmatprep.subr.mxu0 0.0
    %88 = vmatpush1.xpose.msra.mxu0 0.0
    %89 = vmatprep.subr.mxu0 0.0
    %90 = vmatpush1.xpose.msra.mxu0 0.0
    %91 = vmatprep.subr.mxu0 0.0
    %92 = vmatpush1.xpose.msra.mxu0 0.0
    %93 = vmatprep.subr.mxu0 0.0
    %94 = vmatpush1.xpose.msra.mxu0 0.0
    %95 = vmatprep.subr.mxu0 0.0
    %96 = vmatpush1.xpose.msra.mxu0 0.0
    %97 = vmatprep.subr.mxu0 0.0
    %98 = vmatpush1.xpose.msra.mxu0 0.0
    %99 = vmatprep.subr.mxu0 0.0
    %100 = vmatpush1.xpose.msra.mxu0 0.0
    %101 = vmatprep.subr.mxu0 0.0
    %102 = vmatpush1.xpose.msra.mxu0 0.0
    %103 = vmatprep.subr.mxu0 0.0
    %104 = vmatpush1.xpose.msra.mxu0 0.0
    %105 = vmatprep.subr.mxu0 0.0
    %106 = vmatpush1.xpose.msra.mxu0 0.0
    %107 = vmatprep.subr.mxu0 0.0
    %108 = vmatpush1.xpose.msra.mxu0 0.0
    %109 = vmatprep.subr.mxu0 0.0
    %110 = vmatpush1.xpose.msra.mxu0 0.0
    %111 = vmatprep.subr.mxu0 0.0
    %112 = vmatpush1.xpose.msra.mxu0 0.0
    %113 = vmatprep.subr.mxu0 0.0
    %114 = vmatpush1.xpose.msra.mxu0 0.0
    %115 = vmatprep.subr.mxu0 0.0
    %116 = vmatpush1.xpose.msra.mxu0 0.0
    %117 = vmatprep.mubr.f32.mxu0 0.0
    %118 = vmatmul.mubr.f32.gmra.mrb[0].mxu0 %v30
    %v119 = vpop.f32.mrb[0].mxu0
    %v120 = vadd.f32 0.0, %v119
    %v121 = vpop.f32.mrb[0].mxu0
    %122 = vmatprep.mubr.f32.mxu0 0.0
    %123 = vmatmul.mubr.f32.gmra.mrb[0].mxu0 %v33
    %v124 = vpop.f32.mrb[0].mxu0
    %v125 = vadd.f32 0.0, %v124
    %v126 = vpop.f32.mrb[0].mxu0
    %127 = vmatprep.mubr.f32.mxu0 0.0
    %128 = vmatmul.mubr.f32.gmra.mrb[0].mxu0 %v36
    %v129 = vpop.f32.mrb[0].mxu0
    %v130 = vadd.f32 0.0, %v129
    %v131 = vpop.f32.mrb[0].mxu0
    %132 = vmatprep.mubr.f32.mxu0 0.0
    %133 = vmatmul.mubr.f32.gmra.mrb[0].mxu0 %v39
    %v134 = vpop.f32.mrb[0].mxu0
    %v135 = vadd.f32 0.0, %v134
    %v136 = vpop.f32.mrb[0].mxu0
    %137 = vmatprep.mubr.f32.mxu0 0.0
    %138 = vmatmul.mubr.f32.gmra.mrb[0].mxu0 %v42
    %v139 = vpop.f32.mrb[0].mxu0
    %v140 = vadd.f32 0.0, %v139
    %v141 = vpop.f32.mrb[0].mxu0
    %142 = vmatprep.mubr.f32.mxu0 0.0
    %143 = vmatmul.mubr.f32.gmra.mrb[0].mxu0 %v45
    %v144 = vpop.f32.mrb[0].mxu0
    %v145 = vadd.f32 0.0, %v144
    %v146 = vpop.f32.mrb[0].mxu0
    %147 = vmatprep.mubr.f32.mxu0 0.0
    %148 = vmatmul.mubr.f32.gmra.mrb[0].mxu0 %v48
    %v149 = vpop.f32.mrb[0].mxu0
    %v150 = vadd.f32 0.0, %v149
    %v151 = vpop.f32.mrb[0].mxu0
    %152 = vmatprep.mubr.f32.mxu0 0.0
    %153 = vmatmul.mubr.f32.gmra.mrb[0].mxu0 %v51
    %v154 = vpop.f32.mrb[0].mxu0
    %v155 = vadd.f32 0.0, %v154
    %v156 = vpop.f32.mrb[0].mxu0
    %157 = vdwg.mxu0
    %v158 = vmul.f32 %v12, %v12
    %v159 = vmul.f32 %v13, %v13
    %v160 = vmul.f32 %v14, %v14
    %v161 = vmul.f32 %v15, %v15
    %v162 = vmul.f32 %v16, %v16
    %v163 = vmul.f32 %v17, %v17
    %v164 = vmul.f32 %v18, %v18
    %v165 = vmul.f32 %v19, %v19
    %v166 = vsel %vm28, %v158, 0.0
    %167 = vadd.xlane.f32.xlu0 %v166
    %v168 = vpop.xlane.xlu0 %167
    %v169 = vsel %vm28, %v159, 0.0
    %170 = vadd.xlane.f32.xlu0 %v169
    %v171 = vpop.xlane.xlu0 %170
    %v172 = vsel %vm28, %v160, 0.0
    %173 = vadd.xlane.f32.xlu0 %v172
    %v174 = vpop.xlane.xlu0 %173
    %v175 = vsel %vm28, %v161, 0.0
    %176 = vadd.xlane.f32.xlu0 %v175
    %v177 = vpop.xlane.xlu0 %176
    %v178 = vsel %vm28, %v162, 0.0
    %179 = vadd.xlane.f32.xlu0 %v178
    %v180 = vpop.xlane.xlu0 %179
    %v181 = vsel %vm28, %v163, 0.0
    %182 = vadd.xlane.f32.xlu0 %v181
    %v183 = vpop.xlane.xlu0 %182
    %v184 = vsel %vm28, %v164, 0.0
    %185 = vadd.xlane.f32.xlu0 %v184
    %v186 = vpop.xlane.xlu0 %185
    %v187 = vsel %vm28, %v165, 0.0
    %188 = vadd.xlane.f32.xlu0 %v187
    %v189 = vpop.xlane.xlu0 %188
    %v190 = vmul.f32 %v120, 2.0
    %v191 = vmul.f32 %v125, 2.0
    %v192 = vmul.f32 %v130, 2.0
    %v193 = vmul.f32 %v135, 2.0
    %v194 = vmul.f32 %v140, 2.0
    %v195 = vmul.f32 %v145, 2.0
    %v196 = vmul.f32 %v150, 2.0
    %v197 = vmul.f32 %v155, 2.0
    %v198 = vsub.f32 %v168, %v190
    %v199 = vsub.f32 %v171, %v191
    %v200 = vsub.f32 %v174, %v192
    %v201 = vsub.f32 %v177, %v193
    %v202 = vsub.f32 %v180, %v194
    %v203 = vsub.f32 %v183, %v195
    %v204 = vsub.f32 %v186, %v196
    %v205 = vsub.f32 %v189, %v197
    %206 = vxpose.xlu0.b32.start [1/16] %v168, 128
    %207 = vxpose.xlu0.b32.cont [2/16] %v171, 128
    %208 = vxpose.xlu0.b32.cont [3/16] %v174, 128
    %209 = vxpose.xlu0.b32.cont [4/16] %v177, 128
    %210 = vxpose.xlu0.b32.cont [5/16] %v180, 128
    %211 = vxpose.xlu0.b32.cont [6/16] %v183, 128
    %212 = vxpose.xlu0.b32.cont [7/16] %v186, 128
    %213 = vxpose.xlu0.b32.cont [8/16] %v189, 128
    %214 = vxpose.xlu0.b32.cont [9/16] 0.0, 128
    %215 = vxpose.xlu0.b32.cont [10/16] 0.0, 128
    %216 = vxpose.xlu0.b32.cont [11/16] 0.0, 128
    %217 = vxpose.xlu0.b32.cont [12/16] 0.0, 128
    %218 = vxpose.xlu0.b32.cont [13/16] 0.0, 128
    %219 = vxpose.xlu0.b32.cont [14/16] 0.0, 128
    %220 = vxpose.xlu0.b32.cont [15/16] 0.0, 128
    %221 = vxpose.xlu0.b32.end [16/16] 0.0, 128
    %v222 = vpop.trf.xlu0
    %v223 = vpop.trf.xlu0
    %v224 = vpop.trf.xlu0
    %v225 = vpop.trf.xlu0
    %v226 = vpop.trf.xlu0
    %v227 = vpop.trf.xlu0
    %v228 = vpop.trf.xlu0
    %v229 = vpop.trf.xlu0
    %v230 = vpop.trf.xlu0
    %v231 = vpop.trf.xlu0
    %v232 = vpop.trf.xlu0
    %v233 = vpop.trf.xlu0
    %v234 = vpop.trf.xlu0
    %v235 = vpop.trf.xlu0
    %v236 = vpop.trf.xlu0
    %v237 = vpop.trf.xlu0
    %v238 = vlaneseq
    %v239 = vshrl.u32 %v238, 7
    %v240 = vsub.s32 0, %v239
    %v241 = vrot.slane %v222, %v240
    %v242 = vadd.f32 %v198, %v241
    %v243 = vadd.f32 %v199, %v241
    %v244 = vadd.f32 %v200, %v241
    %v245 = vadd.f32 %v201, %v241
    %v246 = vadd.f32 %v202, %v241
    %v247 = vadd.f32 %v203, %v241
    %v248 = vadd.f32 %v204, %v241
    %v249 = vadd.f32 %v205, %v241
    %v250 = vmax.f32 %v242, 1e-08
    %v251 = vmax.f32 %v243, 1e-08
    %v252 = vmax.f32 %v244, 1e-08
    %v253 = vmax.f32 %v245, 1e-08
    %v254 = vmax.f32 %v246, 1e-08
    %v255 = vmax.f32 %v247, 1e-08
    %v256 = vmax.f32 %v248, 1e-08
    %v257 = vmax.f32 %v249, 1e-08
    %v258 = vrsqrt.pop %v250
    %v259 = vmul.f32 %v250, %v258
    %vm260 = vcmp.eq.f32.partialorder %v250, inf
    %v261 = vsel %vm260, %v250, %v259
    %vm262 = vcmp.eq.f32.partialorder %v250, 0.0
    %v263 = vand.u32 %v250, 2147483648
    %v264 = vsel %vm262, %v263, %v261
    %v265 = vrsqrt.pop %v251
    %v266 = vmul.f32 %v251, %v265
    %vm267 = vcmp.eq.f32.partialorder %v251, inf
    %v268 = vsel %vm267, %v251, %v266
    %vm269 = vcmp.eq.f32.partialorder %v251, 0.0
    %v270 = vand.u32 %v251, 2147483648
    %v271 = vsel %vm269, %v270, %v268
    %v272 = vrsqrt.pop %v252
    %v273 = vmul.f32 %v252, %v272
    %vm274 = vcmp.eq.f32.partialorder %v252, inf
    %v275 = vsel %vm274, %v252, %v273
    %vm276 = vcmp.eq.f32.partialorder %v252, 0.0
    %v277 = vand.u32 %v252, 2147483648
    %v278 = vsel %vm276, %v277, %v275
    %v279 = vrsqrt.pop %v253
    %v280 = vmul.f32 %v253, %v279
    %vm281 = vcmp.eq.f32.partialorder %v253, inf
    %v282 = vsel %vm281, %v253, %v280
    %vm283 = vcmp.eq.f32.partialorder %v253, 0.0
    %v284 = vand.u32 %v253, 2147483648
    %v285 = vsel %vm283, %v284, %v282
    %v286 = vrsqrt.pop %v254
    %v287 = vmul.f32 %v254, %v286
    %vm288 = vcmp.eq.f32.partialorder %v254, inf
    %v289 = vsel %vm288, %v254, %v287
    %vm290 = vcmp.eq.f32.partialorder %v254, 0.0
    %v291 = vand.u32 %v254, 2147483648
    %v292 = vsel %vm290, %v291, %v289
    %v293 = vrsqrt.pop %v255
    %v294 = vmul.f32 %v255, %v293
    %vm295 = vcmp.eq.f32.partialorder %v255, inf
    %v296 = vsel %vm295, %v255, %v294
    %vm297 = vcmp.eq.f32.partialorder %v255, 0.0
    %v298 = vand.u32 %v255, 2147483648
    %v299 = vsel %vm297, %v298, %v296
    %v300 = vrsqrt.pop %v256
    %v301 = vmul.f32 %v256, %v300
    %vm302 = vcmp.eq.f32.partialorder %v256, inf
    %v303 = vsel %vm302, %v256, %v301
    %vm304 = vcmp.eq.f32.partialorder %v256, 0.0
    %v305 = vand.u32 %v256, 2147483648
    %v306 = vsel %vm304, %v305, %v303
    %v307 = vrsqrt.pop %v257
    %v308 = vmul.f32 %v257, %v307
    %vm309 = vcmp.eq.f32.partialorder %v257, inf
    %v310 = vsel %vm309, %v257, %v308
    %vm311 = vcmp.eq.f32.partialorder %v257, 0.0
    %v312 = vand.u32 %v257, 2147483648
    %v313 = vsel %vm311, %v312, %v310
    %vm314 = vcmask 130048
    %v316 = vsel %vm314, %v20, 0
    %v319 = vsel %vm314, %v21, 0
    %v322 = vsel %vm314, %v22, 0
    %v325 = vsel %vm314, %v23, 0
    %v328 = vsel %vm314, %v24, 0
    %v331 = vsel %vm314, %v25, 0
    %v334 = vsel %vm314, %v26, 0
    %v337 = vsel %vm314, %v27, 0
    %339 = vmatprep.subr.mxu0 0.0
    %340 = vmatpush1.xpose.msra.mxu0 %v316
    %341 = vmatprep.subr.mxu0 0.0
    %342 = vmatpush1.xpose.msra.mxu0 %v319
    %343 = vmatprep.subr.mxu0 0.0
    %344 = vmatpush1.xpose.msra.mxu0 %v322
    %345 = vmatprep.subr.mxu0 0.0
    %346 = vmatpush1.xpose.msra.mxu0 %v325
    %347 = vmatprep.subr.mxu0 0.0
    %348 = vmatpush1.xpose.msra.mxu0 %v328
    %349 = vmatprep.subr.mxu0 0.0
    %350 = vmatpush1.xpose.msra.mxu0 %v331
    %351 = vmatprep.subr.mxu0 0.0
    %352 = vmatpush1.xpose.msra.mxu0 %v334
    %353 = vmatprep.subr.mxu0 0.0
    %354 = vmatpush1.xpose.msra.mxu0 %v337
    %355 = vmatprep.subr.mxu0 0.0
    %356 = vmatpush1.xpose.msra.mxu0 0.0
    %357 = vmatprep.subr.mxu0 0.0
    %358 = vmatpush1.xpose.msra.mxu0 0.0
    %359 = vmatprep.subr.mxu0 0.0
    %360 = vmatpush1.xpose.msra.mxu0 0.0
    %361 = vmatprep.subr.mxu0 0.0
    %362 = vmatpush1.xpose.msra.mxu0 0.0
    %363 = vmatprep.subr.mxu0 0.0
    %364 = vmatpush1.xpose.msra.mxu0 0.0
    %365 = vmatprep.subr.mxu0 0.0
    %366 = vmatpush1.xpose.msra.mxu0 0.0
    %367 = vmatprep.subr.mxu0 0.0
    %368 = vmatpush1.xpose.msra.mxu0 0.0
    %369 = vmatprep.subr.mxu0 0.0
    %370 = vmatpush1.xpose.msra.mxu0 0.0
    %371 = vmatprep.subr.mxu0 0.0
    %372 = vmatpush1.xpose.msra.mxu0 0.0
    %373 = vmatprep.subr.mxu0 0.0
    %374 = vmatpush1.xpose.msra.mxu0 0.0
    %375 = vmatprep.subr.mxu0 0.0
    %376 = vmatpush1.xpose.msra.mxu0 0.0
    %377 = vmatprep.subr.mxu0 0.0
    %378 = vmatpush1.xpose.msra.mxu0 0.0
    %379 = vmatprep.subr.mxu0 0.0
    %380 = vmatpush1.xpose.msra.mxu0 0.0
    %381 = vmatprep.subr.mxu0 0.0
    %382 = vmatpush1.xpose.msra.mxu0 0.0
    %383 = vmatprep.subr.mxu0 0.0
    %384 = vmatpush1.xpose.msra.mxu0 0.0
    %385 = vmatprep.subr.mxu0 0.0
    %386 = vmatpush1.xpose.msra.mxu0 0.0
    %387 = vmatprep.subr.mxu0 0.0
    %388 = vmatpush1.xpose.msra.mxu0 0.0
    %389 = vmatprep.subr.mxu0 0.0
    %390 = vmatpush1.xpose.msra.mxu0 0.0
    %391 = vmatprep.subr.mxu0 0.0
    %392 = vmatpush1.xpose.msra.mxu0 0.0
    %393 = vmatprep.subr.mxu0 0.0
    %394 = vmatpush1.xpose.msra.mxu0 0.0
    %395 = vmatprep.subr.mxu0 0.0
    %396 = vmatpush1.xpose.msra.mxu0 0.0
    %397 = vmatprep.subr.mxu0 0.0
    %398 = vmatpush1.xpose.msra.mxu0 0.0
    %399 = vmatprep.subr.mxu0 0.0
    %400 = vmatpush1.xpose.msra.mxu0 0.0
    %401 = vmatprep.subr.mxu0 0.0
    %402 = vmatpush1.xpose.msra.mxu0 0.0
    %403 = vmatprep.mubr.f32.mxu0 0.0
    %404 = vmatmul.mubr.f32.gmra.mrb[0].mxu0 %v316
    %v405 = vpop.f32.mrb[0].mxu0
    %v406 = vadd.f32 0.0, %v405
    %v407 = vpop.f32.mrb[0].mxu0
    %408 = vmatprep.mubr.f32.mxu0 0.0
    %409 = vmatmul.mubr.f32.gmra.mrb[0].mxu0 %v319
    %v410 = vpop.f32.mrb[0].mxu0
    %v411 = vadd.f32 0.0, %v410
    %v412 = vpop.f32.mrb[0].mxu0
    %413 = vmatprep.mubr.f32.mxu0 0.0
    %414 = vmatmul.mubr.f32.gmra.mrb[0].mxu0 %v322
    %v415 = vpop.f32.mrb[0].mxu0
    %v416 = vadd.f32 0.0, %v415
    %v417 = vpop.f32.mrb[0].mxu0
    %418 = vmatprep.mubr.f32.mxu0 0.0
    %419 = vmatmul.mubr.f32.gmra.mrb[0].mxu0 %v325
    %v420 = vpop.f32.mrb[0].mxu0
    %v421 = vadd.f32 0.0, %v420
    %v422 = vpop.f32.mrb[0].mxu0
    %423 = vmatprep.mubr.f32.mxu0 0.0
    %424 = vmatmul.mubr.f32.gmra.mrb[0].mxu0 %v328
    %v425 = vpop.f32.mrb[0].mxu0
    %v426 = vadd.f32 0.0, %v425
    %v427 = vpop.f32.mrb[0].mxu0
    %428 = vmatprep.mubr.f32.mxu0 0.0
    %429 = vmatmul.mubr.f32.gmra.mrb[0].mxu0 %v331
    %v430 = vpop.f32.mrb[0].mxu0
    %v431 = vadd.f32 0.0, %v430
    %v432 = vpop.f32.mrb[0].mxu0
    %433 = vmatprep.mubr.f32.mxu0 0.0
    %434 = vmatmul.mubr.f32.gmra.mrb[0].mxu0 %v334
    %v435 = vpop.f32.mrb[0].mxu0
    %v436 = vadd.f32 0.0, %v435
    %v437 = vpop.f32.mrb[0].mxu0
    %438 = vmatprep.mubr.f32.mxu0 0.0
    %439 = vmatmul.mubr.f32.gmra.mrb[0].mxu0 %v337
    %v440 = vpop.f32.mrb[0].mxu0
    %v441 = vadd.f32 0.0, %v440
    %v442 = vpop.f32.mrb[0].mxu0
    %443 = vdwg.mxu0
    %v444 = vmul.f32 %v20, %v20
    %v445 = vmul.f32 %v21, %v21
    %v446 = vmul.f32 %v22, %v22
    %v447 = vmul.f32 %v23, %v23
    %v448 = vmul.f32 %v24, %v24
    %v449 = vmul.f32 %v25, %v25
    %v450 = vmul.f32 %v26, %v26
    %v451 = vmul.f32 %v27, %v27
    %v452 = vsel %vm314, %v444, 0.0
    %453 = vadd.xlane.f32.xlu0 %v452
    %v454 = vpop.xlane.xlu0 %453
    %v455 = vsel %vm314, %v445, 0.0
    %456 = vadd.xlane.f32.xlu0 %v455
    %v457 = vpop.xlane.xlu0 %456
    %v458 = vsel %vm314, %v446, 0.0
    %459 = vadd.xlane.f32.xlu0 %v458
    %v460 = vpop.xlane.xlu0 %459
    %v461 = vsel %vm314, %v447, 0.0
    %462 = vadd.xlane.f32.xlu0 %v461
    %v463 = vpop.xlane.xlu0 %462
    %v464 = vsel %vm314, %v448, 0.0
    %465 = vadd.xlane.f32.xlu0 %v464
    %v466 = vpop.xlane.xlu0 %465
    %v467 = vsel %vm314, %v449, 0.0
    %468 = vadd.xlane.f32.xlu0 %v467
    %v469 = vpop.xlane.xlu0 %468
    %v470 = vsel %vm314, %v450, 0.0
    %471 = vadd.xlane.f32.xlu0 %v470
    %v472 = vpop.xlane.xlu0 %471
    %v473 = vsel %vm314, %v451, 0.0
    %474 = vadd.xlane.f32.xlu0 %v473
    %v475 = vpop.xlane.xlu0 %474
    %v476 = vmul.f32 %v406, 2.0
    %v477 = vmul.f32 %v411, 2.0
    %v478 = vmul.f32 %v416, 2.0
    %v479 = vmul.f32 %v421, 2.0
    %v480 = vmul.f32 %v426, 2.0
    %v481 = vmul.f32 %v431, 2.0
    %v482 = vmul.f32 %v436, 2.0
    %v483 = vmul.f32 %v441, 2.0
    %v484 = vsub.f32 %v454, %v476
    %v485 = vsub.f32 %v457, %v477
    %v486 = vsub.f32 %v460, %v478
    %v487 = vsub.f32 %v463, %v479
    %v488 = vsub.f32 %v466, %v480
    %v489 = vsub.f32 %v469, %v481
    %v490 = vsub.f32 %v472, %v482
    %v491 = vsub.f32 %v475, %v483
    %492 = vxpose.xlu0.b32.start [1/16] %v454, 128
    %493 = vxpose.xlu0.b32.cont [2/16] %v457, 128
    %494 = vxpose.xlu0.b32.cont [3/16] %v460, 128
    %495 = vxpose.xlu0.b32.cont [4/16] %v463, 128
    %496 = vxpose.xlu0.b32.cont [5/16] %v466, 128
    %497 = vxpose.xlu0.b32.cont [6/16] %v469, 128
    %498 = vxpose.xlu0.b32.cont [7/16] %v472, 128
    %499 = vxpose.xlu0.b32.cont [8/16] %v475, 128
    %500 = vxpose.xlu0.b32.cont [9/16] 0.0, 128
    %501 = vxpose.xlu0.b32.cont [10/16] 0.0, 128
    %502 = vxpose.xlu0.b32.cont [11/16] 0.0, 128
    %503 = vxpose.xlu0.b32.cont [12/16] 0.0, 128
    %504 = vxpose.xlu0.b32.cont [13/16] 0.0, 128
    %505 = vxpose.xlu0.b32.cont [14/16] 0.0, 128
    %506 = vxpose.xlu0.b32.cont [15/16] 0.0, 128
    %507 = vxpose.xlu0.b32.end [16/16] 0.0, 128
    %v508 = vpop.trf.xlu0
    %v509 = vpop.trf.xlu0
    %v510 = vpop.trf.xlu0
    %v511 = vpop.trf.xlu0
    %v512 = vpop.trf.xlu0
    %v513 = vpop.trf.xlu0
    %v514 = vpop.trf.xlu0
    %v515 = vpop.trf.xlu0
    %v516 = vpop.trf.xlu0
    %v517 = vpop.trf.xlu0
    %v518 = vpop.trf.xlu0
    %v519 = vpop.trf.xlu0
    %v520 = vpop.trf.xlu0
    %v521 = vpop.trf.xlu0
    %v522 = vpop.trf.xlu0
    %v523 = vpop.trf.xlu0
    %v524 = vlaneseq
    %v525 = vshrl.u32 %v524, 7
    %v526 = vsub.s32 0, %v525
    %v527 = vrot.slane %v508, %v526
    %v528 = vadd.f32 %v484, %v527
    %v529 = vadd.f32 %v485, %v527
    %v530 = vadd.f32 %v486, %v527
    %v531 = vadd.f32 %v487, %v527
    %v532 = vadd.f32 %v488, %v527
    %v533 = vadd.f32 %v489, %v527
    %v534 = vadd.f32 %v490, %v527
    %v535 = vadd.f32 %v491, %v527
    %v536 = vmax.f32 %v528, 1e-08
    %v537 = vmax.f32 %v529, 1e-08
    %v538 = vmax.f32 %v530, 1e-08
    %v539 = vmax.f32 %v531, 1e-08
    %v540 = vmax.f32 %v532, 1e-08
    %v541 = vmax.f32 %v533, 1e-08
    %v542 = vmax.f32 %v534, 1e-08
    %v543 = vmax.f32 %v535, 1e-08
    %v544 = vrsqrt.pop %v536
    %v545 = vmul.f32 %v536, %v544
    %vm546 = vcmp.eq.f32.partialorder %v536, inf
    %v547 = vsel %vm546, %v536, %v545
    %vm548 = vcmp.eq.f32.partialorder %v536, 0.0
    %v549 = vand.u32 %v536, 2147483648
    %v550 = vsel %vm548, %v549, %v547
    %v551 = vrsqrt.pop %v537
    %v552 = vmul.f32 %v537, %v551
    %vm553 = vcmp.eq.f32.partialorder %v537, inf
    %v554 = vsel %vm553, %v537, %v552
    %vm555 = vcmp.eq.f32.partialorder %v537, 0.0
    %v556 = vand.u32 %v537, 2147483648
    %v557 = vsel %vm555, %v556, %v554
    %v558 = vrsqrt.pop %v538
    %v559 = vmul.f32 %v538, %v558
    %vm560 = vcmp.eq.f32.partialorder %v538, inf
    %v561 = vsel %vm560, %v538, %v559
    %vm562 = vcmp.eq.f32.partialorder %v538, 0.0
    %v563 = vand.u32 %v538, 2147483648
    %v564 = vsel %vm562, %v563, %v561
    %v565 = vrsqrt.pop %v539
    %v566 = vmul.f32 %v539, %v565
    %vm567 = vcmp.eq.f32.partialorder %v539, inf
    %v568 = vsel %vm567, %v539, %v566
    %vm569 = vcmp.eq.f32.partialorder %v539, 0.0
    %v570 = vand.u32 %v539, 2147483648
    %v571 = vsel %vm569, %v570, %v568
    %v572 = vrsqrt.pop %v540
    %v573 = vmul.f32 %v540, %v572
    %vm574 = vcmp.eq.f32.partialorder %v540, inf
    %v575 = vsel %vm574, %v540, %v573
    %vm576 = vcmp.eq.f32.partialorder %v540, 0.0
    %v577 = vand.u32 %v540, 2147483648
    %v578 = vsel %vm576, %v577, %v575
    %v579 = vrsqrt.pop %v541
    %v580 = vmul.f32 %v541, %v579
    %vm581 = vcmp.eq.f32.partialorder %v541, inf
    %v582 = vsel %vm581, %v541, %v580
    %vm583 = vcmp.eq.f32.partialorder %v541, 0.0
    %v584 = vand.u32 %v541, 2147483648
    %v585 = vsel %vm583, %v584, %v582
    %v586 = vrsqrt.pop %v542
    %v587 = vmul.f32 %v542, %v586
    %vm588 = vcmp.eq.f32.partialorder %v542, inf
    %v589 = vsel %vm588, %v542, %v587
    %vm590 = vcmp.eq.f32.partialorder %v542, 0.0
    %v591 = vand.u32 %v542, 2147483648
    %v592 = vsel %vm590, %v591, %v589
    %v593 = vrsqrt.pop %v543
    %v594 = vmul.f32 %v543, %v593
    %vm595 = vcmp.eq.f32.partialorder %v543, inf
    %v596 = vsel %vm595, %v543, %v594
    %vm597 = vcmp.eq.f32.partialorder %v543, 0.0
    %v598 = vand.u32 %v543, 2147483648
    %v599 = vsel %vm597, %v598, %v596
    %vm600 = vcmask 523264
    %v601 = vsel %vm600, %v264, 0.0
    %602 = vadd.xlane.f32.xlu0 %v601
    %v603 = vpop.xlane.xlu0 %602
    %v604 = vsel %vm600, %v271, 0.0
    %605 = vadd.xlane.f32.xlu0 %v604
    %v606 = vpop.xlane.xlu0 %605
    %v607 = vsel %vm600, %v278, 0.0
    %608 = vadd.xlane.f32.xlu0 %v607
    %v609 = vpop.xlane.xlu0 %608
    %v610 = vsel %vm600, %v285, 0.0
    %611 = vadd.xlane.f32.xlu0 %v610
    %v612 = vpop.xlane.xlu0 %611
    %v613 = vsel %vm600, %v292, 0.0
    %614 = vadd.xlane.f32.xlu0 %v613
    %v615 = vpop.xlane.xlu0 %614
    %v616 = vsel %vm600, %v299, 0.0
    %617 = vadd.xlane.f32.xlu0 %v616
    %v618 = vpop.xlane.xlu0 %617
    %v619 = vsel %vm600, %v306, 0.0
    %620 = vadd.xlane.f32.xlu0 %v619
    %v621 = vpop.xlane.xlu0 %620
    %v622 = vsel %vm600, %v313, 0.0
    %623 = vadd.xlane.f32.xlu0 %v622
    %v624 = vpop.xlane.xlu0 %623
    %v625 = vsel %vm600, %v550, 0.0
    %626 = vadd.xlane.f32.xlu0 %v625
    %v627 = vpop.xlane.xlu0 %626
    %v628 = vsel %vm600, %v557, 0.0
    %629 = vadd.xlane.f32.xlu0 %v628
    %v630 = vpop.xlane.xlu0 %629
    %v631 = vsel %vm600, %v564, 0.0
    %632 = vadd.xlane.f32.xlu0 %v631
    %v633 = vpop.xlane.xlu0 %632
    %v634 = vsel %vm600, %v571, 0.0
    %635 = vadd.xlane.f32.xlu0 %v634
    %v636 = vpop.xlane.xlu0 %635
    %v637 = vsel %vm600, %v578, 0.0
    %638 = vadd.xlane.f32.xlu0 %v637
    %v639 = vpop.xlane.xlu0 %638
    %v640 = vsel %vm600, %v585, 0.0
    %641 = vadd.xlane.f32.xlu0 %v640
    %v642 = vpop.xlane.xlu0 %641
    %v643 = vsel %vm600, %v592, 0.0
    %644 = vadd.xlane.f32.xlu0 %v643
    %v645 = vpop.xlane.xlu0 %644
    %v646 = vsel %vm600, %v599, 0.0
    %647 = vadd.xlane.f32.xlu0 %v646
    %v648 = vpop.xlane.xlu0 %647
    %vm649 = vcmask 7168
    %v650 = vsel %vm649, %v603, 0.0
    %v651 = vsel %vm649, %v606, 0.0
    %v652 = vadd.f32 %v650, %v651
    %v653 = vsel %vm649, %v609, 0.0
    %v654 = vadd.f32 %v652, %v653
    %v655 = vsel %vm649, %v612, 0.0
    %v656 = vadd.f32 %v654, %v655
    %v657 = vsel %vm649, %v615, 0.0
    %v658 = vadd.f32 %v656, %v657
    %v659 = vsel %vm649, %v618, 0.0
    %v660 = vadd.f32 %v658, %v659
    %v661 = vsel %vm649, %v621, 0.0
    %v662 = vadd.f32 %v660, %v661
    %v663 = vsel %vm649, %v624, 0.0
    %v664 = vadd.f32 %v662, %v663
    %665 = vadd.xlane.f32.xlu0 %v664
    %v666 = vpop.xlane.xlu0 %665
    %v667 = vrot.slane %v666, 4
    %v668 = vadd.f32 %v666, %v667
    %v669 = vrot.slane %v668, 2
    %v670 = vadd.f32 %v668, %v669
    %v671 = vrot.slane %v670, 1
    %v672 = vadd.f32 %v670, %v671
    %s673 = vtos %v672
    %s674 = smul.f32 %s673, 0.00024414063
    %v675 = vsel %vm649, %v627, 0.0
    %v676 = vsel %vm649, %v630, 0.0
    %v677 = vadd.f32 %v675, %v676
    %v678 = vsel %vm649, %v633, 0.0
    %v679 = vadd.f32 %v677, %v678
    %v680 = vsel %vm649, %v636, 0.0
    %v681 = vadd.f32 %v679, %v680
    %v682 = vsel %vm649, %v639, 0.0
    %v683 = vadd.f32 %v681, %v682
    %v684 = vsel %vm649, %v642, 0.0
    %v685 = vadd.f32 %v683, %v684
    %v686 = vsel %vm649, %v645, 0.0
    %v687 = vadd.f32 %v685, %v686
    %v688 = vsel %vm649, %v648, 0.0
    %v689 = vadd.f32 %v687, %v688
    %690 = vadd.xlane.f32.xlu0 %v689
    %v691 = vpop.xlane.xlu0 %690
    %v692 = vrot.slane %v691, 4
    %v693 = vadd.f32 %v691, %v692
    %v694 = vrot.slane %v693, 2
    %v695 = vadd.f32 %v693, %v694
    %v696 = vrot.slane %v695, 1
    %v697 = vadd.f32 %v695, %v696
    %s698 = vtos %v697
    %s699 = smul.f32 %s698, 0.00024414063
    %700 = vxpose.xlu0.b32.start [1/16] %v603, 128
    %701 = vxpose.xlu0.b32.cont [2/16] %v606, 128
    %702 = vxpose.xlu0.b32.cont [3/16] %v609, 128
    %703 = vxpose.xlu0.b32.cont [4/16] %v612, 128
    %704 = vxpose.xlu0.b32.cont [5/16] %v615, 128
    %705 = vxpose.xlu0.b32.cont [6/16] %v618, 128
    %706 = vxpose.xlu0.b32.cont [7/16] %v621, 128
    %707 = vxpose.xlu0.b32.cont [8/16] %v624, 128
    %708 = vxpose.xlu0.b32.cont [9/16] 0.0, 128
    %709 = vxpose.xlu0.b32.cont [10/16] 0.0, 128
    %710 = vxpose.xlu0.b32.cont [11/16] 0.0, 128
    %711 = vxpose.xlu0.b32.cont [12/16] 0.0, 128
    %712 = vxpose.xlu0.b32.cont [13/16] 0.0, 128
    %713 = vxpose.xlu0.b32.cont [14/16] 0.0, 128
    %714 = vxpose.xlu0.b32.cont [15/16] 0.0, 128
    %715 = vxpose.xlu0.b32.end [16/16] 0.0, 128
    %v716 = vpop.trf.xlu0
    %v717 = vpop.trf.xlu0
    %v718 = vpop.trf.xlu0
    %v719 = vpop.trf.xlu0
    %v720 = vpop.trf.xlu0
    %v721 = vpop.trf.xlu0
    %v722 = vpop.trf.xlu0
    %v723 = vpop.trf.xlu0
    %v724 = vpop.trf.xlu0
    %v725 = vpop.trf.xlu0
    %v726 = vpop.trf.xlu0
    %v727 = vpop.trf.xlu0
    %v728 = vpop.trf.xlu0
    %v729 = vpop.trf.xlu0
    %v730 = vpop.trf.xlu0
    %v731 = vpop.trf.xlu0
    %v732 = vmul.f32 %v716, 0.015625
    %v733 = vlaneseq
    %v734 = vshrl.u32 %v733, 7
    %v735 = vsub.s32 0, %v734
    %v736 = vrot.slane %v732, %v735
    %v737 = vsub.f32 %v264, %v736
    %v738 = vsub.f32 %v271, %v736
    %v739 = vsub.f32 %v278, %v736
    %v740 = vsub.f32 %v285, %v736
    %v741 = vsub.f32 %v292, %v736
    %v742 = vsub.f32 %v299, %v736
    %v743 = vsub.f32 %v306, %v736
    %v744 = vsub.f32 %v313, %v736
    %v745 = vmul.f32 %v603, 0.015625
    %v746 = vmul.f32 %v606, 0.015625
    %v747 = vmul.f32 %v609, 0.015625
    %v748 = vmul.f32 %v612, 0.015625
    %v749 = vmul.f32 %v615, 0.015625
    %v750 = vmul.f32 %v618, 0.015625
    %v751 = vmul.f32 %v621, 0.015625
    %v752 = vmul.f32 %v624, 0.015625
    %v753 = vsub.f32 %v737, %v745
    %v754 = vsub.f32 %v738, %v746
    %v755 = vsub.f32 %v739, %v747
    %v756 = vsub.f32 %v740, %v748
    %v757 = vsub.f32 %v741, %v749
    %v758 = vsub.f32 %v742, %v750
    %v759 = vsub.f32 %v743, %v751
    %v760 = vsub.f32 %v744, %v752
    %v761 = vstv %s674
    %v762 = vadd.f32 %v753, %v761
    %v763 = vadd.f32 %v754, %v761
    %v764 = vadd.f32 %v755, %v761
    %v765 = vadd.f32 %v756, %v761
    %v766 = vadd.f32 %v757, %v761
    %v767 = vadd.f32 %v758, %v761
    %v768 = vadd.f32 %v759, %v761
    %v769 = vadd.f32 %v760, %v761
    %770 = vxpose.xlu0.b32.start [1/16] %v627, 128
    %771 = vxpose.xlu0.b32.cont [2/16] %v630, 128
    %772 = vxpose.xlu0.b32.cont [3/16] %v633, 128
    %773 = vxpose.xlu0.b32.cont [4/16] %v636, 128
    %774 = vxpose.xlu0.b32.cont [5/16] %v639, 128
    %775 = vxpose.xlu0.b32.cont [6/16] %v642, 128
    %776 = vxpose.xlu0.b32.cont [7/16] %v645, 128
    %777 = vxpose.xlu0.b32.cont [8/16] %v648, 128
    %778 = vxpose.xlu0.b32.cont [9/16] 0.0, 128
    %779 = vxpose.xlu0.b32.cont [10/16] 0.0, 128
    %780 = vxpose.xlu0.b32.cont [11/16] 0.0, 128
    %781 = vxpose.xlu0.b32.cont [12/16] 0.0, 128
    %782 = vxpose.xlu0.b32.cont [13/16] 0.0, 128
    %783 = vxpose.xlu0.b32.cont [14/16] 0.0, 128
    %784 = vxpose.xlu0.b32.cont [15/16] 0.0, 128
    %785 = vxpose.xlu0.b32.end [16/16] 0.0, 128
    %v786 = vpop.trf.xlu0
    %v787 = vpop.trf.xlu0
    %v788 = vpop.trf.xlu0
    %v789 = vpop.trf.xlu0
    %v790 = vpop.trf.xlu0
    %v791 = vpop.trf.xlu0
    %v792 = vpop.trf.xlu0
    %v793 = vpop.trf.xlu0
    %v794 = vpop.trf.xlu0
    %v795 = vpop.trf.xlu0
    %v796 = vpop.trf.xlu0
    %v797 = vpop.trf.xlu0
    %v798 = vpop.trf.xlu0
    %v799 = vpop.trf.xlu0
    %v800 = vpop.trf.xlu0
    %v801 = vpop.trf.xlu0
    %v802 = vmul.f32 %v786, 0.015625
    %v803 = vlaneseq
    %v804 = vshrl.u32 %v803, 7
    %v805 = vsub.s32 0, %v804
    %v806 = vrot.slane %v802, %v805
    %v807 = vsub.f32 %v550, %v806
    %v808 = vsub.f32 %v557, %v806
    %v809 = vsub.f32 %v564, %v806
    %v810 = vsub.f32 %v571, %v806
    %v811 = vsub.f32 %v578, %v806
    %v812 = vsub.f32 %v585, %v806
    %v813 = vsub.f32 %v592, %v806
    %v814 = vsub.f32 %v599, %v806
    %v815 = vmul.f32 %v627, 0.015625
    %v816 = vmul.f32 %v630, 0.015625
    %v817 = vmul.f32 %v633, 0.015625
    %v818 = vmul.f32 %v636, 0.015625
    %v819 = vmul.f32 %v639, 0.015625
    %v820 = vmul.f32 %v642, 0.015625
    %v821 = vmul.f32 %v645, 0.015625
    %v822 = vmul.f32 %v648, 0.015625
    %v823 = vsub.f32 %v807, %v815
    %v824 = vsub.f32 %v808, %v816
    %v825 = vsub.f32 %v809, %v817
    %v826 = vsub.f32 %v810, %v818
    %v827 = vsub.f32 %v811, %v819
    %v828 = vsub.f32 %v812, %v820
    %v829 = vsub.f32 %v813, %v821
    %v830 = vsub.f32 %v814, %v822
    %v831 = vstv %s699
    %v832 = vadd.f32 %v823, %v831
    %v833 = vadd.f32 %v824, %v831
    %v834 = vadd.f32 %v825, %v831
    %v835 = vadd.f32 %v826, %v831
    %v836 = vadd.f32 %v827, %v831
    %v837 = vadd.f32 %v828, %v831
    %v838 = vadd.f32 %v829, %v831
    %v839 = vadd.f32 %v830, %v831
    %v840 = vmul.f32 %v762, %v832
    %v841 = vmul.f32 %v763, %v833
    %v842 = vmul.f32 %v764, %v834
    %v843 = vmul.f32 %v765, %v835
    %v844 = vmul.f32 %v766, %v836
    %v845 = vmul.f32 %v767, %v837
    %v846 = vmul.f32 %v768, %v838
    %v847 = vmul.f32 %v769, %v839
    %v848 = vsel %vm600, %v840, 0.0
    %v849 = vsel %vm600, %v841, 0.0
    %v850 = vadd.f32 %v848, %v849
    %v851 = vsel %vm600, %v842, 0.0
    %v852 = vadd.f32 %v850, %v851
    %v853 = vsel %vm600, %v843, 0.0
    %v854 = vadd.f32 %v852, %v853
    %v855 = vsel %vm600, %v844, 0.0
    %v856 = vadd.f32 %v854, %v855
    %v857 = vsel %vm600, %v845, 0.0
    %v858 = vadd.f32 %v856, %v857
    %v859 = vsel %vm600, %v846, 0.0
    %v860 = vadd.f32 %v858, %v859
    %v861 = vsel %vm600, %v847, 0.0
    %v862 = vadd.f32 %v860, %v861
    %863 = vadd.xlane.f32.xlu0 %v862
    %v864 = vpop.xlane.xlu0 %863
    %v865 = vrot.slane %v864, 4
    %v866 = vadd.f32 %v864, %v865
    %v867 = vrot.slane %v866, 2
    %v868 = vadd.f32 %v866, %v867
    %v869 = vrot.slane %v868, 1
    %v870 = vadd.f32 %v868, %v869
    %s871 = vtos %v870
    %v872 = vmul.f32 %v762, %v762
    %v873 = vmul.f32 %v763, %v763
    %v874 = vmul.f32 %v764, %v764
    %v875 = vmul.f32 %v765, %v765
    %v876 = vmul.f32 %v766, %v766
    %v877 = vmul.f32 %v767, %v767
    %v878 = vmul.f32 %v768, %v768
    %v879 = vmul.f32 %v769, %v769
    %v880 = vsel %vm600, %v872, 0.0
    %v881 = vsel %vm600, %v873, 0.0
    %v882 = vadd.f32 %v880, %v881
    %v883 = vsel %vm600, %v874, 0.0
    %v884 = vadd.f32 %v882, %v883
    %v885 = vsel %vm600, %v875, 0.0
    %v886 = vadd.f32 %v884, %v885
    %v887 = vsel %vm600, %v876, 0.0
    %v888 = vadd.f32 %v886, %v887
    %v889 = vsel %vm600, %v877, 0.0
    %v890 = vadd.f32 %v888, %v889
    %v891 = vsel %vm600, %v878, 0.0
    %v892 = vadd.f32 %v890, %v891
    %v893 = vsel %vm600, %v879, 0.0
    %v894 = vadd.f32 %v892, %v893
    %895 = vadd.xlane.f32.xlu0 %v894
    %v896 = vpop.xlane.xlu0 %895
    %v897 = vrot.slane %v896, 4
    %v898 = vadd.f32 %v896, %v897
    %v899 = vrot.slane %v898, 2
    %v900 = vadd.f32 %v898, %v899
    %v901 = vrot.slane %v900, 1
    %v902 = vadd.f32 %v900, %v901
    %s903 = vtos %v902
    %v904 = vmul.f32 %v832, %v832
    %v905 = vmul.f32 %v833, %v833
    %v906 = vmul.f32 %v834, %v834
    %v907 = vmul.f32 %v835, %v835
    %v908 = vmul.f32 %v836, %v836
    %v909 = vmul.f32 %v837, %v837
    %v910 = vmul.f32 %v838, %v838
    %v911 = vmul.f32 %v839, %v839
    %v912 = vsel %vm600, %v904, 0.0
    %v913 = vsel %vm600, %v905, 0.0
    %v914 = vadd.f32 %v912, %v913
    %v915 = vsel %vm600, %v906, 0.0
    %v916 = vadd.f32 %v914, %v915
    %v917 = vsel %vm600, %v907, 0.0
    %v918 = vadd.f32 %v916, %v917
    %v919 = vsel %vm600, %v908, 0.0
    %v920 = vadd.f32 %v918, %v919
    %v921 = vsel %vm600, %v909, 0.0
    %v922 = vadd.f32 %v920, %v921
    %v923 = vsel %vm600, %v910, 0.0
    %v924 = vadd.f32 %v922, %v923
    %v925 = vsel %vm600, %v911, 0.0
    %v926 = vadd.f32 %v924, %v925
    %927 = vadd.xlane.f32.xlu0 %v926
    %v928 = vpop.xlane.xlu0 %927
    %v929 = vrot.slane %v928, 4
    %v930 = vadd.f32 %v928, %v929
    %v931 = vrot.slane %v930, 2
    %v932 = vadd.f32 %v930, %v931
    %v933 = vrot.slane %v932, 1
    %v934 = vadd.f32 %v932, %v933
    %s935 = vtos %v934
    %s936 = smax.f32 %s871, 0.0
    %s937 = smax.f32 %s903, 0.0
    %s938 = smax.f32 %s935, 0.0
    %v939 = vstv %s936
    %v940 = vrsqrt.pop %v939
    %v941 = vmul.f32 %v939, %v940
    %vm942 = vcmp.eq.f32.partialorder %v939, inf
    %v943 = vsel %vm942, %v939, %v941
    %vm944 = vcmp.eq.f32.partialorder %v939, 0.0
    %v945 = vand.u32 %v939, 2147483648
    %v946 = vsel %vm944, %v945, %v943
    %s947 = vtos %v946
    %s948 = smul.f32 %s937, %s938
    %v949 = vstv %s948
    %v950 = vrsqrt.pop %v949
    %v951 = vmul.f32 %v949, %v950
    %vm952 = vcmp.eq.f32.partialorder %v949, inf
    %v953 = vsel %vm952, %v949, %v951
    %vm954 = vcmp.eq.f32.partialorder %v949, 0.0
    %v955 = vand.u32 %v949, 2147483648
    %v956 = vsel %vm954, %v955, %v953
    %s957 = vtos %v956
    %v958 = vstv %s957
    %v959 = vrsqrt.pop %v958
    %v960 = vmul.f32 %v958, %v959
    %vm961 = vcmp.eq.f32.partialorder %v958, inf
    %v962 = vsel %vm961, %v958, %v960
    %vm963 = vcmp.eq.f32.partialorder %v958, 0.0
    %v964 = vand.u32 %v958, 2147483648
    %v965 = vsel %vm963, %v964, %v962
    %s966 = vtos %v965
    %v967 = vstv %s966
    %v968 = vrcp.pop %v967
    %s969 = vtos %v968
    %s970 = smul.f32 %s947, %s969
    %s971 = scalar_lea.smem [#allocation2], 0
    %972 = sst [smem:[%s971]] %s970
    // Predicated region
    $region10: #{tpu_custom_call.1} parent=1 // pred_check
      _
    $region11: #{tpu_custom_call.1} parent=1 // pred_check_branch
      %974 = sbr.rel (0) target = $region13
    $region12: #{tpu_custom_call.1} parent=1 // pred_region
      %s976 = ssub.s32 16, 16
      %977 = vsyncadd [#allocation3], %s976
      %980 = dma.smem_to_hbm [#allocation2], 16, %s2, [#allocation3]
    $region13: #{tpu_custom_call.1} parent=1 // pred_fallthru
      _
    // Predicated region
    $region14: #{tpu_custom_call.1} parent=1 // pred_check
      _
    $region15: #{tpu_custom_call.1} parent=1 // pred_check_branch
      %982 = sbr.rel (0) target = $region17
    $region16: #{tpu_custom_call.1} parent=1 // pred_region
      %983 = dma.done [#allocation3], 16
    $region17: #{tpu_custom_call.1} parent=1 // pred_fallthru
      _
    %984 = sfence
    %985 = vsyncpa [#allocation3], 1

</llo_original>
